<compile_context>
chip_gen: v7x
topology: tpu7x:2x2x1
jax: 0.10.0
libtpu: 0.0.40
codegen_flags: <defaults>
</compile_context>

<pallas_src>
import functools

import jax
import jax.numpy as jnp
from jax.experimental import pallas as pl
from jax.experimental.pallas import tpu as pltpu


def _round_up(x, m):
    return ((x + m - 1) // m) * m


def _vmem_budget_bytes():
    """Generation-aware scoped-VMEM budget (~3/4 of per-core VMEM, capped)."""
    try:
        info = pltpu.get_tpu_info()
        cap = int(getattr(info, "vmem_capacity_bytes", 64 * 1024 * 1024))
    except Exception:
        cap = 64 * 1024 * 1024                      # conservative (v7x per-TC)
    return max(32 * 1024 * 1024, min((cap * 3) // 4, 96 * 1024 * 1024))


def _mlp_gate(pooled, w1_ref, w2_ref):
    """pooled: (C, 2) f32 = [avg | max]. Returns sigmoid gate, (C, 1) f32."""
    w1 = w1_ref[...]
    w2 = w2_ref[...]
    wdt = w1.dtype  # tiny matmuls in the weights' native dtype (bf16-friendly)
    h = jnp.dot(w1, pooled.astype(wdt), preferred_element_type=jnp.float32)   # (C//r, 2)
    h = jnp.maximum(h, 0.0)                                                    # ReLU
    y = jnp.dot(w2, h.astype(wdt), preferred_element_type=jnp.float32)         # (C, 2)
    logits = jnp.sum(y, axis=1, keepdims=True)          # avg-branch + max-branch
    return jax.nn.sigmoid(logits)                       # (C, 1) f32


# ----------------------------- fused single pass -----------------------------


def _ca_fused_kernel(x_ref, w1_ref, w2_ref, o_ref, *, hw_actual):
    # Full-extent block: (C, HW) equals the array dims, so reductions are
    # handled correctly by the compiler without an explicit padding mask.
    x = x_ref[0]                                        # (C, HW), native dtype
    c = x.shape[0]

    s = jnp.sum(x, axis=1, keepdims=True, dtype=jnp.float32)                   # (C, 1)
    mx = jnp.max(x, axis=1, keepdims=True).astype(jnp.float32)                 # (C, 1)
    avg = s * (1.0 / hw_actual)

    # Stack [avg | max] into one (C, 2) RHS -> single MLP pass.
    col = jax.lax.broadcasted_iota(jnp.int32, (c, 2), 1)
    pooled = jnp.where(col == 0, avg, mx)                                      # (C, 2)

    gate = _mlp_gate(pooled, w1_ref, w2_ref)                                   # (C, 1) f32
    # Gate is cast to the slab dtype before the multiply to avoid a full-slab
    # f32 temp when x is bf16 (tiny precision delta vs. an f32-gate reference).
    o_ref[0] = (gate.astype(x.dtype) * x).astype(o_ref.dtype)


# --------------------------- two-pass: reduce + scale ------------------------


def _ca_reduce_kernel(x_ref, w1_ref, w2_ref, gate_ref, sum_acc, max_acc,
                      *, hw_actual, thw):
    j = pl.program_id(1)
    nj = pl.num_programs(1)

    @pl.when(j == 0)
    def _():
        sum_acc[...] = jnp.zeros_like(sum_acc)
        max_acc[...] = jnp.full_like(max_acc, -jnp.inf)

    x = x_ref[0]                                        # (C, thw), native dtype
    tail = hw_actual % thw                              # static: valid lanes of last tile

    def _accum_unmasked():
        sum_acc[...] += jnp.sum(x, axis=1, keepdims=True, dtype=jnp.float32)
        max_acc[...] = jnp.maximum(
            max_acc[...], jnp.max(x, axis=1, keepdims=True).astype(jnp.float32))

    if tail == 0:
        _accum_unmasked()
    else:
        # Only the last tile can contain OOB lanes -> mask only there.
        @pl.when(j != nj - 1)
        def _():
            _accum_unmasked()

        @pl.when(j == nj - 1)
        def _():
            lane = jax.lax.broadcasted_iota(jnp.int32, x.shape, 1)
            valid = lane < tail
            xs = jnp.where(valid, x, jnp.zeros_like(x))
            # Native-dtype sentinel: no full-slab f32 temp.
            xm = jnp.where(valid, x, jnp.full_like(x, jnp.finfo(x.dtype).min))
            sum_acc[...] += jnp.sum(xs, axis=1, keepdims=True, dtype=jnp.float32)
            max_acc[...] = jnp.maximum(
                max_acc[...], jnp.max(xm, axis=1, keepdims=True).astype(jnp.float32))

    @pl.when(j == nj - 1)
    def _():
        c = sum_acc.shape[0]
        avg = sum_acc[...] * (1.0 / hw_actual)
        col = jax.lax.broadcasted_iota(jnp.int32, (c, 2), 1)
        pooled = jnp.where(col == 0, avg, max_acc[...])                        # (C, 2)
        gate_ref[0] = _mlp_gate(pooled, w1_ref, w2_ref).astype(gate_ref.dtype)


def _ca_scale_kernel(x_ref, gate_ref, o_ref):
    x = x_ref[0]                                        # (C, thw), native dtype
    g = gate_ref[0]                                     # (C, 1) f32
    o_ref[0] = (g.astype(x.dtype) * x).astype(o_ref.dtype)


# ---------------------------------- wrapper ----------------------------------


def channel_attention(x_nchw, w1, w2, *, force_two_pass=False, thw_override=None):
    """ChannelAttention forward.  x_nchw: (B, C, H, W); w1: (C//r, C); w2: (C, C//r)."""
    B, C, H, W = x_nchw.shape
    HW = H * W
    dtype = x_nchw.dtype
    itemsize = jnp.dtype(dtype).itemsize

    # Free (contiguous) reshape; no pad / slice passes over HBM.
    x_flat = x_nchw.reshape(B, C, HW)

    slab_bytes = C * HW * itemsize
    w_bytes = (w1.size * jnp.dtype(w1.dtype).itemsize
               + w2.size * jnp.dtype(w2.dtype).itemsize)

    budget = _vmem_budget_bytes()
    # Fused path footprint: double-buffered in + out slab (~4x slab) + weights.
    fused_footprint = 4 * slab_bytes + 2 * w_bytes + (2 << 20)
    use_fused = (not force_two_pass) and fused_footprint <= budget

    cr = w1.shape[0]
    mlp_flops = 8 * C * cr                              # two (C x C//r) dots, 2 columns

    if use_fused:
        cost = pl.CostEstimate(
            flops=int(B * (2 * C * HW + mlp_flops)),
            transcendentals=int(B * C),
            bytes_accessed=int(2 * B * slab_bytes + w_bytes),
        )
        kernel = functools.partial(_ca_fused_kernel, hw_actual=HW)
        out_flat = pl.pallas_call(
            kernel,
            out_shape=jax.ShapeDtypeStruct((B, C, HW), dtype),
            grid_spec=pltpu.PrefetchScalarGridSpec(
                num_scalar_prefetch=0,
                grid=(B,),
                in_specs=[
                    pl.BlockSpec((1, C, HW), lambda b: (b, 0, 0)),
                    pl.BlockSpec(w1.shape, lambda b: (0, 0)),
                    pl.BlockSpec(w2.shape, lambda b: (0, 0)),
                ],
                out_specs=pl.BlockSpec((1, C, HW), lambda b: (b, 0, 0)),
            ),
            compiler_params=pltpu.CompilerParams(
                dimension_semantics=("parallel",),
                vmem_limit_bytes=budget),
            cost_estimate=cost,
        )(x_flat, w1, w2)
    else:
        # Spatial tile: ~4 MiB per block (lane-dense, multiple of 128), cdiv grid.
        if thw_override is not None:
            thw = max(128, (int(thw_override) // 128) * 128)
        else:
            thw = (4 * 1024 * 1024) // max(1, C * itemsize)
            thw = max(128, (thw // 128) * 128)
        thw = min(thw, _round_up(HW, 128))
        n_hw = pl.cdiv(HW, thw)
        block_bytes = C * thw * itemsize
        two_pass_vmem = min(budget, max(32 * 1024 * 1024,
                                        5 * block_bytes + (2 << 20)))

        # --- pass 1: per-channel sum / max -> shared MLP -> sigmoid gate ---
        red_cost = pl.CostEstimate(
            flops=int(B * (2 * C * HW + mlp_flops)),
            transcendentals=int(B * C),
            bytes_accessed=int(B * slab_bytes + w_bytes + B * C * 4),
        )
        red_kernel = functools.partial(_ca_reduce_kernel, hw_actual=HW, thw=thw)
        gate = pl.pallas_call(
            red_kernel,
            out_shape=jax.ShapeDtypeStruct((B, C, 1), jnp.float32),
            grid_spec=pltpu.PrefetchScalarGridSpec(
                num_scalar_prefetch=0,
                grid=(B, n_hw),
                in_specs=[
                    pl.BlockSpec((1, C, thw), lambda b, j: (b, 0, j)),
                    pl.BlockSpec(w1.shape, lambda b, j: (0, 0)),
                    pl.BlockSpec(w2.shape, lambda b, j: (0, 0)),
                ],
                out_specs=pl.BlockSpec((1, C, 1), lambda b, j: (b, 0, 0)),
                scratch_shapes=[pltpu.VMEM((C, 1), jnp.float32),
                                pltpu.VMEM((C, 1), jnp.float32)],
            ),
            compiler_params=pltpu.CompilerParams(
                dimension_semantics=("parallel", "arbitrary"),
                vmem_limit_bytes=two_pass_vmem),
            cost_estimate=red_cost,
        )(x_flat, w1, w2)

        # --- pass 2: lane-dense elementwise rescale (OOB writes dropped) ---
        scale_cost = pl.CostEstimate(
            flops=int(B * C * HW),
            transcendentals=0,
            bytes_accessed=int(2 * B * slab_bytes + B * C * 4),
        )
        out_flat = pl.pallas_call(
            _ca_scale_kernel,
            out_shape=jax.ShapeDtypeStruct((B, C, HW), dtype),
            grid_spec=pltpu.PrefetchScalarGridSpec(
                num_scalar_prefetch=0,
                grid=(B, n_hw),
                in_specs=[
                    pl.BlockSpec((1, C, thw), lambda b, j: (b, 0, j)),
                    pl.BlockSpec((1, C, 1), lambda b, j: (b, 0, 0)),
                ],
                out_specs=pl.BlockSpec((1, C, thw), lambda b, j: (b, 0, j)),
            ),
            compiler_params=pltpu.CompilerParams(
                dimension_semantics=("parallel", "parallel"),
                vmem_limit_bytes=two_pass_vmem),
            cost_estimate=scale_cost,
        )(x_flat, gate)

    return out_flat.reshape(B, C, H, W)


# --------------------------------- reference ---------------------------------


def _reference(x, w1, w2):
    avg = jnp.mean(x, axis=(2, 3))                      # (B, C)
    mx = jnp.max(x, axis=(2, 3))                        # (B, C)

    def mlp(v):                                         # (B, C)
        h = jnp.maximum(v @ w1.T, 0.0)                  # (B, C//r)
        return h @ w2.T                                 # (B, C)

    gate = jax.nn.sigmoid(mlp(avg) + mlp(mx))
    return gate[:, :, None, None] * x


if __name__ == "__main__":
    key = jax.random.PRNGKey(0)
    kx, k1, k2, kx2, k3, k4, kx3 = jax.random.split(key, 7)
    ratio = 2

    # --- case 1: small shapes, lane-aligned HW (fused + forced two-pass) ---
    B, C, H, W = 2, 4, 16, 16
    x = jax.random.normal(kx, (B, C, H, W), dtype=jnp.float32)
    # 1x1 convs with no bias == linear layers on the channel axis.
    w1 = jax.random.normal(k1, (C // ratio, C), dtype=jnp.float32) * 0.5
    w2 = jax.random.normal(k2, (C, C // ratio), dtype=jnp.float32) * 0.5

    out = jax.block_until_ready(channel_attention(x, w1, w2))
    ref = _reference(x, w1, w2)
    assert out.shape == (B, C, H, W)
    assert jnp.allclose(out, ref, atol=1e-5, rtol=1e-5)

    out2 = jax.block_until_ready(channel_attention(x, w1, w2, force_two_pass=True))
    assert jnp.allclose(out2, ref, atol=1e-5, rtol=1e-5)

    # --- case 2: HW not a multiple of 128 (unpadded full-extent fused block,
    #             and a masked partial tile on the two-pass path) ---
    B2, C2, H2, W2 = 2, 8, 10, 10
    x2 = jax.random.normal(kx2, (B2, C2, H2, W2), dtype=jnp.float32)
    w1b = jax.random.normal(k3, (C2 // ratio, C2), dtype=jnp.float32) * 0.5
    w2b = jax.random.normal(k4, (C2, C2 // ratio), dtype=jnp.float32) * 0.5
    refb = _reference(x2, w1b, w2b)

    outb = jax.block_until_ready(channel_attention(x2, w1b, w2b))
    assert outb.shape == (B2, C2, H2, W2)
    assert jnp.allclose(outb, refb, atol=1e-5, rtol=1e-5)

    outb2 = jax.block_until_ready(
        channel_attention(x2, w1b, w2b, force_two_pass=True))
    assert jnp.allclose(outb2, refb, atol=1e-5, rtol=1e-5)

    # --- case 3: multi-tile reduce with a masked (partial) last tile ---
    B3, C3, H3, W3 = 1, 8, 23, 23                       # HW = 529 -> 5 tiles of 128
    x3 = jax.random.normal(kx3, (B3, C3, H3, W3), dtype=jnp.float32)
    refc = _reference(x3, w1b, w2b)
    outc = jax.block_until_ready(
        channel_attention(x3, w1b, w2b, force_two_pass=True, thw_override=128))
    assert jnp.allclose(outc, refc, atol=1e-5, rtol=1e-5)

    print("KERNEL_OK")
</pallas_src>

<mosaic_0001>
module attributes {stable_mosaic.version = 11 : i64} {
  func.func @_ca_fused_kernel(%arg0: i32, %arg1: memref<1x4x256xf32, #tpu.memory_space<vmem>>, %arg2: memref<2x4xf32, #tpu.memory_space<vmem>>, %arg3: memref<4x2xf32, #tpu.memory_space<vmem>>, %arg4: memref<1x4x256xf32, #tpu.memory_space<vmem>>) attributes {dimension_semantics = [#tpu.dimension_semantics<parallel>], iteration_bounds = array<i64: 2>, scalar_prefetch = 0 : i64, scratch_operands = 0 : i64, tpu.core_type = #tpu.core_type<tc>, window_params = [{transform_indices = @transform_0, window_bounds = array<i64: 1, 4, 256>}, {pipeline_mode = #tpu.pipeline_mode<synchronous>, transform_indices = @transform_1, window_bounds = array<i64: 2, 4>}, {pipeline_mode = #tpu.pipeline_mode<synchronous>, transform_indices = @transform_2, window_bounds = array<i64: 4, 2>}, {transform_indices = @transform_3, window_bounds = array<i64: 1, 4, 256>}]} {
    %c0 = arith.constant 0 : index
    %c0_0 = arith.constant 0 : index
    %c0_1 = arith.constant 0 : index
    %0 = vector.load %arg1[%c0, %c0_0, %c0_1] : memref<1x4x256xf32, #tpu.memory_space<vmem>>, vector<1x4x256xf32>
    %1 = vector.shape_cast %0 : vector<1x4x256xf32> to vector<4x256xf32>
    %cst = arith.constant dense<0.000000e+00> : vector<4xf32>
    %2 = vector.multi_reduction <add>, %1, %cst [1] : vector<4x256xf32> to vector<4xf32>
    %3 = vector.shape_cast %2 : vector<4xf32> to vector<4x1xf32>
    %cst_2 = arith.constant dense<0xFF800000> : vector<4xf32>
    %4 = vector.multi_reduction <maximumf>, %1, %cst_2 [1] : vector<4x256xf32> to vector<4xf32>
    %5 = vector.shape_cast %4 : vector<4xf32> to vector<4x1xf32>
    %cst_3 = arith.constant 3.906250e-03 : f32
    %6 = vector.broadcast %cst_3 : f32 to vector<4x1xf32>
    %7 = arith.mulf %3, %6 : vector<4x1xf32>
    %8 = tpu.iota {dimensions = array<i32: 1>} : vector<4x2xi32>
    %c0_i32 = arith.constant 0 : i32
    %9 = vector.broadcast %c0_i32 : i32 to vector<4x2xi32>
    %10 = arith.cmpi eq, %8, %9 : vector<4x2xi32>
    %11 = vector.shape_cast %7 : vector<4x1xf32> to vector<4x1xf32>
    %12 = vector.broadcast %11 : vector<4x1xf32> to vector<4x2xf32>
    %13 = vector.shape_cast %5 : vector<4x1xf32> to vector<4x1xf32>
    %14 = vector.broadcast %13 : vector<4x1xf32> to vector<4x2xf32>
    %15 = arith.select %10, %12, %14 : vector<4x2xi1>, vector<4x2xf32>
    %c0_4 = arith.constant 0 : index
    %c0_5 = arith.constant 0 : index
    %16 = vector.load %arg2[%c0_4, %c0_5] : memref<2x4xf32, #tpu.memory_space<vmem>>, vector<2x4xf32>
    %c0_6 = arith.constant 0 : index
    %c0_7 = arith.constant 0 : index
    %17 = vector.load %arg3[%c0_6, %c0_7] : memref<4x2xf32, #tpu.memory_space<vmem>>, vector<4x2xf32>
    %cst_8 = arith.constant dense<0.000000e+00> : vector<2x2xf32>
    %18 = tpu.matmul %16, %15, %cst_8 {dimension_numbers = #tpu.dot_dimension_numbers<[1], [0], [0], [1], [0, 0, 1, 1], [], []>} : vector<2x4xf32>, vector<4x2xf32>, vector<2x2xf32> -> vector<2x2xf32>
    %cst_9 = arith.constant 0.000000e+00 : f32
    %19 = vector.broadcast %cst_9 : f32 to vector<2x2xf32>
    %20 = arith.maximumf %18, %19 : vector<2x2xf32>
    %cst_10 = arith.constant dense<0.000000e+00> : vector<4x2xf32>
    %21 = tpu.matmul %17, %20, %cst_10 {dimension_numbers = #tpu.dot_dimension_numbers<[1], [0], [0], [1], [0, 0, 1, 1], [], []>} : vector<4x2xf32>, vector<2x2xf32>, vector<4x2xf32> -> vector<4x2xf32>
    %cst_11 = arith.constant dense<0.000000e+00> : vector<4xf32>
    %22 = vector.multi_reduction <add>, %21, %cst_11 [1] : vector<4x2xf32> to vector<4xf32>
    %23 = vector.shape_cast %22 : vector<4xf32> to vector<4x1xf32>
    %24 = arith.negf %23 : vector<4x1xf32>
    %25 = math.exp %24 : vector<4x1xf32>
    %cst_12 = arith.constant 1.000000e+00 : f32
    %26 = vector.broadcast %cst_12 : f32 to vector<4x1xf32>
    %27 = arith.addf %26, %25 : vector<4x1xf32>
    %28 = arith.divf %26, %27 : vector<4x1xf32>
    %29 = vector.broadcast %28 : vector<4x1xf32> to vector<4x256xf32>
    %30 = arith.mulf %29, %1 : vector<4x256xf32>
    %c0_13 = arith.constant 0 : index
    %c0_14 = arith.constant 0 : index
    %c0_15 = arith.constant 0 : index
    %31 = vector.load %arg4[%c0_13, %c0_14, %c0_15] : memref<1x4x256xf32, #tpu.memory_space<vmem>>, vector<1x4x256xf32>
    %32 = vector.shape_cast %31 : vector<1x4x256xf32> to vector<4x256xf32>
    %33 = vector.shape_cast %30 : vector<4x256xf32> to vector<1x4x256xf32>
    tpu.vector_store %arg4[%c0_13, %c0_14, %c0_15], %33 {strides = array<i32>} : memref<1x4x256xf32, #tpu.memory_space<vmem>>, vector<1x4x256xf32>,
    return
  }
  func.func @transform_0(%arg0: i32) -> (i32, i32, i32) {
    %c0_i32 = arith.constant 0 : i32
    %c0_i32_0 = arith.constant 0 : i32
    %c0_i32_1 = arith.constant 0 : i32
    return %arg0, %c0_i32, %c0_i32_0 : i32, i32, i32
  }
  func.func @transform_1(%arg0: i32) -> (i32, i32) {
    %c0_i32 = arith.constant 0 : i32
    %c0_i32_0 = arith.constant 0 : i32
    %c0_i32_1 = arith.constant 0 : i32
    return %c0_i32, %c0_i32_0 : i32, i32
  }
  func.func @transform_2(%arg0: i32) -> (i32, i32) {
    %c0_i32 = arith.constant 0 : i32
    %c0_i32_0 = arith.constant 0 : i32
    %c0_i32_1 = arith.constant 0 : i32
    return %c0_i32, %c0_i32_0 : i32, i32
  }
  func.func @transform_3(%arg0: i32) -> (i32, i32, i32) {
    %c0_i32 = arith.constant 0 : i32
    %c0_i32_0 = arith.constant 0 : i32
    %c0_i32_1 = arith.constant 0 : i32
    return %arg0, %c0_i32, %c0_i32_0 : i32, i32, i32
  }
}

</mosaic_0001>

<llo_original>
// kernel: tpu_custom_call.1
$region0: #{tpu_custom_call.1}
  #allocation0 [shape = 'u32[]', space=smem, size = 0x4, offset = 0x4, fixed_abs, tag = 'smem constant byte address 0x4 - core index']
  #allocation1 [shape = 'u32[144,128]{1,0:T(1,128)}', space=vmem, size = 0x12000, scoped, tag = 'internal scratch']
  %s0 = inlined_call_operand.hbm [shape: f32[2,4,256], index: 0, kind: input, shape index: {}]
  %s1 = inlined_call_operand.vmem [shape: f32[2,4], index: 1, kind: input, shape index: {}]
  %s2 = inlined_call_operand.vmem [shape: f32[4,2], index: 2, kind: input, shape index: {}]
  %s3 = inlined_call_operand.hbm [shape: f32[2,4,256], index: 3, kind: output, shape index: {}]
  %s4 = sld [smem:[#allocation0]]
  $region49: #{tpu_custom_call.1} parent=0
    _
  %s6 = ssub.s32 1, %s4
  %s7 = scalar_select 0, %s6, %s4
  $region1: #{tpu_custom_call.1} parent=0
    #allocation2 [shape = 'u8[8192]{0}', space=vmem, size = 0x2000, scoped, tag = 'input window, operand 0']
    #allocation3 [shape = 's32[2]{0}', space=sflag, size = 0x8, scoped, tag = 'scoped memory for tpu_custom_call.1']
    #allocation4 [shape = 's32[2]{0}', space=sflag, size = 0x8, scoped, tag = 'scoped memory for tpu_custom_call.1']
    #allocation5 [shape = 'u8[8192]{0}', space=vmem, size = 0x2000, scoped, tag = 'output window, operand 0']
    %8 = vsyncpa [#allocation3], 0
    %s9 = scalar_lea.sflag [#allocation3], 1
    %10 = vsyncpa %s9, 0
    %11 = vsyncpa [#allocation4], 0
    %s12 = scalar_lea.sflag [#allocation4], 1
    %13 = vsyncpa %s12, 0
    loop: start=0, step=1, limit=4
    $region2: #{tpu_custom_call.1} parent=1 // loop_pre_header
      _
    $region3: #{tpu_custom_call.1} parent=1 // loop_header
      %s15 = sphi 0, %s19
      %p16 = scmp.ge.s32.totalorder %s15, 4
      %s25 = sphi 0, %s27
      %s28 = sphi 0, %s25
      %s29 = sphi 0, %s28
      %s45 = sphi 0, %s29
      %s49 = sphi 0, %s49
      %s51 = sphi 0, %s49
      %s52 = sphi 0, %s51
      %s66 = sphi 0, %s52
      %s70 = sphi 0, %s70
      %s72 = sphi 0, %s70
      %s73 = sphi 0, %s72
      %s87 = sphi 0, %s73
      %s93 = sphi 0, %s95
      %s96 = sphi 0, %s93
      %s97 = sphi 0, %s96
      %s113 = sphi 0, %s97
    $region4: #{tpu_custom_call.1} parent=1 // loop_header_branch
      %18 = sbr.rel (%p16) target = $region8
    $region5: #{tpu_custom_call.1} parent=1 // loop_body
      %s20 = ssub.s32 %s15, 1
      %s21 = ssub.s32 %s15, 2
      %s22 = sadd.s32 %s15, 1
      %s23 = ssub.s32 %s15, %s22
      %p24 = scmp.eq.s32.totalorder %s23, 0
      %s26 = sadd.s32 %s25, 1
      %s27 = scalar_select %p24, %s25, %s26
      %p30 = pneg %p24
      %p31 = scmp.eq.s32.totalorder %s15, 1
      %p32 = por %p30, %p31
      %p33 = scmp.ne.s32.totalorder %s25, %s28
      %p34 = scmp.eq.s32.totalorder %s15, 0
      %p35 = por %p33, %p34
      %p36 = scmp.ne.s32.totalorder %s25, %s28
      %p37 = scmp.eq.s32.totalorder %s20, 1
      %p38 = por %p36, %p37
      %p39 = scmp.ne.s32.totalorder %s28, %s29
      %p40 = scmp.eq.s32.totalorder %s20, 0
      %p41 = por %p39, %p40
      %p42 = scmp.ne.s32.totalorder %s28, %s29
      %p43 = scmp.eq.s32.totalorder %s21, 1
      %p44 = por %p42, %p43
      %p46 = scmp.ne.s32.totalorder %s29, %s45
      %p47 = scmp.eq.s32.totalorder %s21, 0
      %p48 = por %p46, %p47
      %s50 = sadd.s32 %s49, 1
      %p53 = scmp.eq.s32.totalorder %s15, 1
      %p54 = scmp.ne.s32.totalorder %s49, %s51
      %p55 = scmp.eq.s32.totalorder %s15, 0
      %p56 = por %p54, %p55
      %p57 = scmp.ne.s32.totalorder %s49, %s51
      %p58 = scmp.eq.s32.totalorder %s20, 1
      %p59 = por %p57, %p58
      %p60 = scmp.ne.s32.totalorder %s51, %s52
      %p61 = scmp.eq.s32.totalorder %s20, 0
      %p62 = por %p60, %p61
      %p63 = scmp.ne.s32.totalorder %s51, %s52
      %p64 = scmp.eq.s32.totalorder %s21, 1
      %p65 = por %p63, %p64
      %p67 = scmp.ne.s32.totalorder %s52, %s66
      %p68 = scmp.eq.s32.totalorder %s21, 0
      %p69 = por %p67, %p68
      %s71 = sadd.s32 %s70, 1
      %p74 = scmp.eq.s32.totalorder %s15, 1
      %p75 = scmp.ne.s32.totalorder %s70, %s72
      %p76 = scmp.eq.s32.totalorder %s15, 0
      %p77 = por %p75, %p76
      %p78 = scmp.ne.s32.totalorder %s70, %s72
      %p79 = scmp.eq.s32.totalorder %s20, 1
      %p80 = por %p78, %p79
      %p81 = scmp.ne.s32.totalorder %s72, %s73
      %p82 = scmp.eq.s32.totalorder %s20, 0
      %p83 = por %p81, %p82
      %p84 = scmp.ne.s32.totalorder %s72, %s73
      %p85 = scmp.eq.s32.totalorder %s21, 1
      %p86 = por %p84, %p85
      %p88 = scmp.ne.s32.totalorder %s73, %s87
      %p89 = scmp.eq.s32.totalorder %s21, 0
      %p90 = por %p88, %p89
      %s91 = ssub.s32 %s15, %s22
      %p92 = scmp.eq.s32.totalorder %s91, 0
      %s94 = sadd.s32 %s93, 1
      %s95 = scalar_select %p92, %s93, %s94
      %p98 = pneg %p92
      %p99 = scmp.eq.s32.totalorder %s15, 1
      %p100 = por %p98, %p99
      %p101 = scmp.ne.s32.totalorder %s93, %s96
      %p102 = scmp.eq.s32.totalorder %s15, 0
      %p103 = por %p101, %p102
      %p104 = scmp.ne.s32.totalorder %s93, %s96
      %p105 = scmp.eq.s32.totalorder %s20, 1
      %p106 = por %p104, %p105
      %p107 = scmp.ne.s32.totalorder %s96, %s97
      %p108 = scmp.eq.s32.totalorder %s20, 0
      %p109 = por %p107, %p108
      %p110 = scmp.ne.s32.totalorder %s96, %s97
      %p111 = scmp.eq.s32.totalorder %s21, 1
      %p112 = por %p110, %p111
      %p114 = scmp.ne.s32.totalorder %s97, %s113
      %p115 = scmp.eq.s32.totalorder %s21, 0
      %p116 = por %p114, %p115
      %p117 = scmp.le.s32.totalorder 1, %s15
      %p118 = scmp.lt.s32.totalorder %s15, 3
      %p119 = pnand %p117, %p118
      %p120 = pneg %p119
      // Predicated region
      $region9: #{tpu_custom_call.1} parent=5 // pred_check
        _
      $region10: #{tpu_custom_call.1} parent=5 // pred_check_branch
        %122 = sbr.rel (%p119) target = $region12
      $region11: #{tpu_custom_call.1} parent=5 // pred_region
        %s123 = ssub.s32 %s15, 1
        // Predicated region
        $region13: #{tpu_custom_call.1} parent=11 // pred_check
          %p124 = pneg %p62
        $region14: #{tpu_custom_call.1} parent=11 // pred_check_branch
          %126 = sbr.rel (%p124) target = $region16
        $region15: #{tpu_custom_call.1} parent=11 // pred_region
          _
        $region16: #{tpu_custom_call.1} parent=11 // pred_fallthru
          _
        // Predicated region
        $region17: #{tpu_custom_call.1} parent=11 // pred_check
          %p127 = pneg %p83
        $region18: #{tpu_custom_call.1} parent=11 // pred_check_branch
          %129 = sbr.rel (%p127) target = $region20
        $region19: #{tpu_custom_call.1} parent=11 // pred_region
          _
        $region20: #{tpu_custom_call.1} parent=11 // pred_fallthru
          _
      $region12: #{tpu_custom_call.1} parent=5 // pred_fallthru
        _
      %p130 = scmp.lt.s32.totalorder %s15, 2
      // Predicated region
      $region21: #{tpu_custom_call.1} parent=5 // pred_check
        %p131 = pneg %p130
      $region22: #{tpu_custom_call.1} parent=5 // pred_check_branch
        %133 = sbr.rel (%p131) target = $region24
      $region23: #{tpu_custom_call.1} parent=5 // pred_region
        // Predicated region
        $region25: #{tpu_custom_call.1} parent=23 // pred_check
          %p134 = pneg %p35
        $region26: #{tpu_custom_call.1} parent=23 // pred_check_branch
          %136 = sbr.rel (%p134) target = $region28
        $region27: #{tpu_custom_call.1} parent=23 // pred_region
          %s137 = sand.u32 %s25, 1
          %s138 = scalar_lea.sflag [#allocation3], %s137
          %s139 = sand.u32 %s25, 1
          %s140 = smul.addr %s139, 8
          %s141 = scalar_lea.vmem [#allocation2], %s140
          %s143 = ssub.s32 128, 128
          %144 = vsyncadd %s138, %s143
          %s145 = smul.addr %s15, 2
          %s146 = smul.addr %s145, 64
          %s147 = scalar_lea.hbm %s0, %s146
          %s149 = sshll.u32 %s141, 4
          %s150 = int_to_ptr.vmem [resolvable:$true] %s149
          %152 = dma.hbm_to_vmem [thread:$0]  %s147, 128, %s150, %s138
        $region28: #{tpu_custom_call.1} parent=23 // pred_fallthru
          _
      $region24: #{tpu_custom_call.1} parent=5 // pred_fallthru
        _
      %p153 = scmp.le.s32.totalorder 1, %s15
      %p154 = scmp.lt.s32.totalorder %s15, 3
      %p155 = pnand %p153, %p154
      %p156 = pneg %p155
      // Predicated region
      $region29: #{tpu_custom_call.1} parent=5 // pred_check
        _
      $region30: #{tpu_custom_call.1} parent=5 // pred_check_branch
        %158 = sbr.rel (%p155) target = $region32
      $region31: #{tpu_custom_call.1} parent=5 // pred_region
        %s159 = ssub.s32 %s15, 1
        %s160 = sand.u32 %s28, 1
        %s161 = scalar_lea.sflag [#allocation3], %s160
        %s162 = sand.u32 %s28, 1
        %s163 = smul.addr %s162, 8
        %s164 = scalar_lea.vmem [#allocation2], %s163
        // Predicated region
        $region33: #{tpu_custom_call.1} parent=31 // pred_check
          %p165 = pneg %p41
        $region34: #{tpu_custom_call.1} parent=31 // pred_check_branch
          %167 = sbr.rel (%p165) target = $region36
        $region35: #{tpu_custom_call.1} parent=31 // pred_region
          %168 = dma.done %s161, 128
        $region36: #{tpu_custom_call.1} parent=31 // pred_fallthru
          _
        %s169 = sand.u32 %s28, 1
        %s170 = scalar_lea.sflag [#allocation3], %s169
        %s171 = sand.u32 %s28, 1
        %s172 = smul.addr %s171, 8
        %s173 = scalar_lea.vmem [#allocation2], %s172
        %p174 = pneg %p41
        %p175 = pneg %p38
        %p176 = pneg %p62
        %p177 = pneg %p59
        %p178 = pneg %p83
        %p179 = pneg %p80
        %p180 = pneg %p109
        %p181 = pneg %p106
        %s182 = sand.u32 %s96, 1
        %s183 = scalar_lea.sflag [#allocation4], %s182
        %s184 = sand.u32 %s96, 1
        %s185 = smul.addr %s184, 8
        %s186 = scalar_lea.vmem [#allocation5], %s185
        %v187 = vld [vmem:[%s164] sm:$0xff]
        %v189 = vcombine.high %v187, %v187
        %vm191 = vcmask 1043456
        %v192 = vsel %vm191, %v187, 0.0
        %v193 = vsel %vm191, %v189, 0.0
        %v194 = vadd.f32 %v192, %v193
        %195 = vadd.xlane.f32.xlu0 %v194
        %v196 = vpop.xlane.xlu0 %195
        %v197 = vsel %vm191, %v187, -inf
        %v198 = vsel %vm191, %v189, -inf
        %v199 = vmax.f32 %v197, %v198
        %200 = vmax.xlane.f32.xlu0 %v199
        %v201 = vpop.xlane.xlu0 %200
        %v202 = vmul.f32 %v196, 0.00390625
        %v203 = vlaneseq
        %v204 = vand.u32 %v203, 127
        %vm205 = vcmp.eq.s32.totalorder %v204, 0
        %v206 = vsel %vm205, %v202, %v201
        %v207 = vld [vmem:[%s1] sm:$0x3]
        %v208 = vld [vmem:[%s2] sm:$0xf]
        %vm209 = vcmask 31744
        %v211 = vsel %vm209, %v207, 0
        %v214 = vsel %vm191, %v206, 0
        %216 = vmatprep.subr.mxu0 0.0
        %217 = vmatpush1.msra.mxu0 %v214
        %218 = vmatprep.subr.mxu0 0.0
        %219 = vmatpush1.msra.mxu0 0.0
        %220 = vmatprep.subr.mxu0 0.0
        %221 = vmatpush1.msra.mxu0 0.0
        %222 = vmatprep.subr.mxu0 0.0
        %223 = vmatpush1.msra.mxu0 0.0
        %224 = vmatprep.subr.mxu0 0.0
        %225 = vmatpush1.msra.mxu0 0.0
        %226 = vmatprep.subr.mxu0 0.0
        %227 = vmatpush1.msra.mxu0 0.0
        %228 = vmatprep.subr.mxu0 0.0
        %229 = vmatpush1.msra.mxu0 0.0
        %230 = vmatprep.subr.mxu0 0.0
        %231 = vmatpush1.msra.mxu0 0.0
        %232 = vmatprep.subr.mxu0 0.0
        %233 = vmatpush1.msra.mxu0 0.0
        %234 = vmatprep.subr.mxu0 0.0
        %235 = vmatpush1.msra.mxu0 0.0
        %236 = vmatprep.subr.mxu0 0.0
        %237 = vmatpush1.msra.mxu0 0.0
        %238 = vmatprep.subr.mxu0 0.0
        %239 = vmatpush1.msra.mxu0 0.0
        %240 = vmatprep.subr.mxu0 0.0
        %241 = vmatpush1.msra.mxu0 0.0
        %242 = vmatprep.subr.mxu0 0.0
        %243 = vmatpush1.msra.mxu0 0.0
        %244 = vmatprep.subr.mxu0 0.0
        %245 = vmatpush1.msra.mxu0 0.0
        %246 = vmatprep.subr.mxu0 0.0
        %247 = vmatpush1.msra.mxu0 0.0
        %248 = vmatprep.subr.mxu0 0.0
        %249 = vmatpush1.msra.mxu0 0.0
        %250 = vmatprep.subr.mxu0 0.0
        %251 = vmatpush1.msra.mxu0 0.0
        %252 = vmatprep.subr.mxu0 0.0
        %253 = vmatpush1.msra.mxu0 0.0
        %254 = vmatprep.subr.mxu0 0.0
        %255 = vmatpush1.msra.mxu0 0.0
        %256 = vmatprep.subr.mxu0 0.0
        %257 = vmatpush1.msra.mxu0 0.0
        %258 = vmatprep.subr.mxu0 0.0
        %259 = vmatpush1.msra.mxu0 0.0
        %260 = vmatprep.subr.mxu0 0.0
        %261 = vmatpush1.msra.mxu0 0.0
        %262 = vmatprep.subr.mxu0 0.0
        %263 = vmatpush1.msra.mxu0 0.0
        %264 = vmatprep.subr.mxu0 0.0
        %265 = vmatpush1.msra.mxu0 0.0
        %266 = vmatprep.subr.mxu0 0.0
        %267 = vmatpush1.msra.mxu0 0.0
        %268 = vmatprep.subr.mxu0 0.0
        %269 = vmatpush1.msra.mxu0 0.0
        %270 = vmatprep.subr.mxu0 0.0
        %271 = vmatpush1.msra.mxu0 0.0
        %272 = vmatprep.subr.mxu0 0.0
        %273 = vmatpush1.msra.mxu0 0.0
        %274 = vmatprep.subr.mxu0 0.0
        %275 = vmatpush1.msra.mxu0 0.0
        %276 = vmatprep.subr.mxu0 0.0
        %277 = vmatpush1.msra.mxu0 0.0
        %278 = vmatprep.subr.mxu0 0.0
        %279 = vmatpush1.msra.mxu0 0.0
        %280 = vmatprep.mubr.f32.mxu0 0.0
        %281 = vmatmul.mubr.f32.gmra.mrb[0].mxu0 %v211
        %v282 = vpop.f32.mrb[0].mxu0
        %v283 = vadd.f32 0.0, %v282
        %v284 = vpop.f32.mrb[0].mxu0
        %285 = vdwg.mxu0
        %v286 = vmax.f32 %v283, 0.0
        %vm287 = vcmask 15360
        %v289 = vsel %vm287, %v208, 0
        %vm291 = vcmask 1041408
        %v293 = vsel %vm291, %v286, 0
        %295 = vmatprep.subr.mxu0 0.0
        %296 = vmatpush1.msra.mxu0 %v293
        %297 = vmatprep.subr.mxu0 0.0
        %298 = vmatpush1.msra.mxu0 0.0
        %299 = vmatprep.subr.mxu0 0.0
        %300 = vmatpush1.msra.mxu0 0.0
        %301 = vmatprep.subr.mxu0 0.0
        %302 = vmatpush1.msra.mxu0 0.0
        %303 = vmatprep.subr.mxu0 0.0
        %304 = vmatpush1.msra.mxu0 0.0
        %305 = vmatprep.subr.mxu0 0.0
        %306 = vmatpush1.msra.mxu0 0.0
        %307 = vmatprep.subr.mxu0 0.0
        %308 = vmatpush1.msra.mxu0 0.0
        %309 = vmatprep.subr.mxu0 0.0
        %310 = vmatpush1.msra.mxu0 0.0
        %311 = vmatprep.subr.mxu0 0.0
        %312 = vmatpush1.msra.mxu0 0.0
        %313 = vmatprep.subr.mxu0 0.0
        %314 = vmatpush1.msra.mxu0 0.0
        %315 = vmatprep.subr.mxu0 0.0
        %316 = vmatpush1.msra.mxu0 0.0
        %317 = vmatprep.subr.mxu0 0.0
        %318 = vmatpush1.msra.mxu0 0.0
        %319 = vmatprep.subr.mxu0 0.0
        %320 = vmatpush1.msra.mxu0 0.0
        %321 = vmatprep.subr.mxu0 0.0
        %322 = vmatpush1.msra.mxu0 0.0
        %323 = vmatprep.subr.mxu0 0.0
        %324 = vmatpush1.msra.mxu0 0.0
        %325 = vmatprep.subr.mxu0 0.0
        %326 = vmatpush1.msra.mxu0 0.0
        %327 = vmatprep.subr.mxu0 0.0
        %328 = vmatpush1.msra.mxu0 0.0
        %329 = vmatprep.subr.mxu0 0.0
        %330 = vmatpush1.msra.mxu0 0.0
        %331 = vmatprep.subr.mxu0 0.0
        %332 = vmatpush1.msra.mxu0 0.0
        %333 = vmatprep.subr.mxu0 0.0
        %334 = vmatpush1.msra.mxu0 0.0
        %335 = vmatprep.subr.mxu0 0.0
        %336 = vmatpush1.msra.mxu0 0.0
        %337 = vmatprep.subr.mxu0 0.0
        %338 = vmatpush1.msra.mxu0 0.0
        %339 = vmatprep.subr.mxu0 0.0
        %340 = vmatpush1.msra.mxu0 0.0
        %341 = vmatprep.subr.mxu0 0.0
        %342 = vmatpush1.msra.mxu0 0.0
        %343 = vmatprep.subr.mxu0 0.0
        %344 = vmatpush1.msra.mxu0 0.0
        %345 = vmatprep.subr.mxu0 0.0
        %346 = vmatpush1.msra.mxu0 0.0
        %347 = vmatprep.subr.mxu0 0.0
        %348 = vmatpush1.msra.mxu0 0.0
        %349 = vmatprep.subr.mxu0 0.0
        %350 = vmatpush1.msra.mxu0 0.0
        %351 = vmatprep.subr.mxu0 0.0
        %352 = vmatpush1.msra.mxu0 0.0
        %353 = vmatprep.subr.mxu0 0.0
        %354 = vmatpush1.msra.mxu0 0.0
        %355 = vmatprep.subr.mxu0 0.0
        %356 = vmatpush1.msra.mxu0 0.0
        %357 = vmatprep.subr.mxu0 0.0
        %358 = vmatpush1.msra.mxu0 0.0
        %359 = vmatprep.mubr.f32.mxu0 0.0
        %360 = vmatmul.mubr.f32.gmra.mrb[0].mxu0 %v289
        %v361 = vpop.f32.mrb[0].mxu0
        %v362 = vadd.f32 0.0, %v361
        %v363 = vpop.f32.mrb[0].mxu0
        %364 = vdwg.mxu0
        %vm365 = vcmask 11264
        %v366 = vsel %vm365, %v362, 0.0
        %367 = vadd.xlane.f32.xlu0 %v366
        %v368 = vpop.xlane.xlu0 %367
        %v369 = vxor.u32 %v368, 2147483648
        %v370 = vmul.f32 %v369, 1.442695
        %v371 = vpow.pop %v370
        %v372 = vadd.f32 %v371, 1.0
        %v373 = vrcp.pop %v372
        %v374 = vmul.f32 1.0, %v373
        %v375 = vmul.f32 %v374, %v187
        %v376 = vmul.f32 %v374, %v189
        %v379 = vcombine.low %v375, %v376
        %381 = vst [vmem:[%s186] sm:$0xff] %v379
        %s382 = sand.u32 %s96, 1
        %s383 = scalar_lea.sflag [#allocation4], %s382
        %s384 = sand.u32 %s96, 1
        %s385 = smul.addr %s384, 8
        %s386 = scalar_lea.vmem [#allocation5], %s385
        // Predicated region
        $region37: #{tpu_custom_call.1} parent=31 // pred_check
          %p387 = pneg %p106
        $region38: #{tpu_custom_call.1} parent=31 // pred_check_branch
          %389 = sbr.rel (%p387) target = $region40
        $region39: #{tpu_custom_call.1} parent=31 // pred_region
          %s391 = ssub.s32 128, 128
          %392 = vsyncadd %s383, %s391
          %s393 = smul.addr %s20, 2
          %s394 = smul.addr %s393, 64
          %s395 = scalar_lea.hbm %s3, %s394
          %s397 = sshll.u32 %s386, 4
          %s398 = int_to_ptr.vmem [resolvable:$true] %s397
          %400 = dma.vmem_to_hbm [thread:$0]  %s398, 128, %s395, %s383
        $region40: #{tpu_custom_call.1} parent=31 // pred_fallthru
          _
      $region32: #{tpu_custom_call.1} parent=5 // pred_fallthru
        _
      %p401 = scmp.le.s32.totalorder 2, %s15
      // Predicated region
      $region41: #{tpu_custom_call.1} parent=5 // pred_check
        %p402 = pneg %p401
      $region42: #{tpu_custom_call.1} parent=5 // pred_check_branch
        %404 = sbr.rel (%p402) target = $region44
      $region43: #{tpu_custom_call.1} parent=5 // pred_region
        %s405 = ssub.s32 %s15, 2
        // Predicated region
        $region45: #{tpu_custom_call.1} parent=43 // pred_check
          %p406 = pneg %p112
        $region46: #{tpu_custom_call.1} parent=43 // pred_check_branch
          %408 = sbr.rel (%p406) target = $region48
        $region47: #{tpu_custom_call.1} parent=43 // pred_region
          %s409 = sand.u32 %s97, 1
          %s410 = scalar_lea.sflag [#allocation4], %s409
          %s411 = sand.u32 %s97, 1
          %s412 = smul.addr %s411, 8
          %s413 = scalar_lea.vmem [#allocation5], %s412
          %414 = dma.done %s410, 128
        $region48: #{tpu_custom_call.1} parent=43 // pred_fallthru
          _
      $region44: #{tpu_custom_call.1} parent=5 // pred_fallthru
        _
    $region6: #{tpu_custom_call.1} parent=1 // loop_footer
      %s19 = sadd.s32 1, %s15
    $region7: #{tpu_custom_call.1} parent=1 // loop_footer_branch
      %14 = sbr.rel target = $region3
    $region8: #{tpu_custom_call.1} parent=1 // loop_exit
      _
    %415 = vsyncpa [#allocation3], 1
    %s416 = scalar_lea.sflag [#allocation3], 1
    %417 = vsyncpa %s416, 1
    %418 = vsyncpa [#allocation4], 1
    %s419 = scalar_lea.sflag [#allocation4], 1
    %420 = vsyncpa %s419, 1

</llo_original>
